<compile_context>
chip_gen: v5e
topology: v5e:2x2
jax: 0.10.0
libtpu: 0.0.40
codegen_flags: <defaults>
</compile_context>

<pallas_src>
import math
import functools

import jax
import jax.numpy as jnp
from jax.experimental import pallas as pl
from jax.experimental.pallas import tpu as pltpu


def _round_up(x, m):
    return (x + m - 1) // m * m


def _ffn_kernel(x_ref, w1_ref, b1_ref, w2_ref, b2_ref, o_ref, acc_ref, *, act):
    # x_ref:  (tile_m, K*H_pad)  compute dtype (bf16)
    # w1_ref: (K*H_pad, tile_f)  compute dtype, 1/sqrt(K) scale pre-folded
    # b1_ref: (1, tile_f)        f32, scale pre-folded
    # w2_ref: (tile_f, H_pad)    compute dtype
    # b2_ref: (1, H_pad)         f32
    # o_ref:  (tile_m, H_pad)    output tile (resident across the F axis)
    # acc_ref:(tile_m, H_pad)    f32 accumulator scratch
    f = pl.program_id(1)

    @pl.when(f == 0)
    def _():
        acc_ref[...] = jnp.zeros_like(acc_ref)

    # Conv-as-matmul chunk; f32 accumulation on the MXU.
    h = jnp.dot(x_ref[...], w1_ref[...], preferred_element_type=jnp.float32)
    h = h + b1_ref[...]  # conv bias (scale already folded into w1/b1)

    if act == "gelu":
        # exact (erf-based) GELU == torch.nn.functional.gelu default
        h = 0.5 * h * (1.0 + jax.lax.erf(h * (1.0 / math.sqrt(2.0))))
    elif act == "relu":
        h = jnp.maximum(h, 0.0)
    elif act == "swish":
        h = h * jax.nn.sigmoid(h)
    # F.dropout with p=0.0 (module default) is the identity.
    # TODO(synk): dropout with p > 0 (training) not implemented in-kernel.

    # Second matmul: accumulate this F-chunk's contribution into the output.
    acc_ref[...] += jnp.dot(h.astype(x_ref.dtype), w2_ref[...],
                            preferred_element_type=jnp.float32)

    @pl.when(f == pl.num_programs(1) - 1)
    def _():
        o_ref[...] = (acc_ref[...] + b2_ref[...]).astype(o_ref.dtype)


def transformer_ffn_layer(x, conv_w, conv_b, lin_w, lin_b, *,
                          kernel_size=1, padding="SAME", act="gelu",
                          tile_m=512, tile_f=512,
                          compute_dtype=jnp.bfloat16):
    """x: (T, B, hidden) float32 -> (T_out, B, hidden) float32."""
    T, B, H = x.shape
    F_out, H_in, K = conv_w.shape
    assert H_in == H and K == kernel_size

    if padding == "SAME":
        pad_l = pad_r = K // 2
    elif padding == "LEFT":
        pad_l, pad_r = K - 1, 0
    else:
        raise ValueError(padding)
    T_out = T + pad_l + pad_r - K + 1

    # --- lane-dense padding: channel dims up to multiples of 128 ---
    H_pad = _round_up(H, 128)
    x_p = jnp.pad(x, ((0, 0), (0, 0), (0, H_pad - H)))
    KH = K * H_pad

    # --- im2col along time (plain JAX glue) ---
    if K == 1:
        x_col = x_p.reshape(T * B, H_pad)          # pure reshape, no copy blowup
    else:
        # TODO(synk): in-kernel tap accumulation would avoid the K x HBM
        # duplication that this im2col materializes for kernel_size > 1.
        x_t = jnp.pad(x_p, ((pad_l, pad_r), (0, 0), (0, 0)))
        taps = [x_t[k:k + T_out] for k in range(K)]           # each (T_out, B, H_pad)
        x_col = jnp.stack(taps, axis=2).reshape(T_out * B, KH)

    M = T_out * B

    # --- tile sizing (large, 16/128-aligned, capped for tiny inputs) ---
    tile_m_eff = min(tile_m, _round_up(M, 16))
    M_pad = _round_up(M, tile_m_eff)
    tile_f_eff = min(tile_f, _round_up(F_out, 128))
    F_pad = _round_up(F_out, tile_f_eff)

    x_col = jnp.pad(x_col, ((0, M_pad - M), (0, 0))).astype(compute_dtype)

    # --- weights: pad, fold the 1/sqrt(K) scale, cast to compute dtype ---
    scale = float(kernel_size) ** -0.5
    conv_w_p = jnp.pad(conv_w, ((0, F_pad - F_out), (0, H_pad - H), (0, 0)))
    w1 = (jnp.transpose(conv_w_p, (2, 1, 0)).reshape(KH, F_pad)
          * scale).astype(compute_dtype)                       # (KH, F_pad)
    b1 = (jnp.pad(conv_b, (0, F_pad - F_out)) * scale
          ).reshape(1, F_pad).astype(jnp.float32)
    w2 = jnp.pad(lin_w.T, ((0, F_pad - F_out), (0, H_pad - H))
                 ).astype(compute_dtype)                       # (F_pad, H_pad)
    b2 = jnp.pad(lin_b, (0, H_pad - H)).reshape(1, H_pad).astype(jnp.float32)

    grid = (M_pad // tile_m_eff, F_pad // tile_f_eff)
    kernel = functools.partial(_ffn_kernel, act=act)

    itemsize = jnp.dtype(compute_dtype).itemsize
    flops = 2 * M_pad * KH * F_pad + 2 * M_pad * F_pad * H_pad
    bytes_accessed = (grid[1] * M_pad * KH * itemsize          # x re-read per F chunk
                      + KH * F_pad * itemsize + F_pad * H_pad * itemsize
                      + 4 * (F_pad + H_pad)
                      + M_pad * H_pad * 4)

    out = pl.pallas_call(
        kernel,
        out_shape=jax.ShapeDtypeStruct((M_pad, H_pad), jnp.float32),
        grid_spec=pltpu.PrefetchScalarGridSpec(
            num_scalar_prefetch=0,
            grid=grid,
            in_specs=[
                pl.BlockSpec((tile_m_eff, KH), lambda i, f: (i, 0)),
                pl.BlockSpec((KH, tile_f_eff), lambda i, f: (0, f)),
                pl.BlockSpec((1, tile_f_eff), lambda i, f: (0, f)),
                pl.BlockSpec((tile_f_eff, H_pad), lambda i, f: (f, 0)),
                pl.BlockSpec((1, H_pad), lambda i, f: (0, 0)),
            ],
            out_specs=pl.BlockSpec((tile_m_eff, H_pad), lambda i, f: (i, 0)),
            scratch_shapes=[pltpu.VMEM((tile_m_eff, H_pad), jnp.float32)],
        ),
        compiler_params=pltpu.CompilerParams(
            dimension_semantics=("parallel", "arbitrary"),
            vmem_limit_bytes=48 * 1024 * 1024),
        cost_estimate=pl.CostEstimate(
            flops=flops, transcendentals=M_pad * F_pad,
            bytes_accessed=bytes_accessed),
    )(x_col, w1, b1, w2, b2)

    out = out[:M, :H].astype(x.dtype)
    return out.reshape(T_out, B, H)


def ref_forward(x, conv_w, conv_b, lin_w, lin_b, *, kernel_size, padding, act):
    """Plain-JAX f32 reference mirroring the PyTorch forward."""
    K = kernel_size
    pads = [(K // 2, K // 2)] if padding == "SAME" else [(K - 1, 0)]
    x_nct = jnp.transpose(x, (1, 2, 0))                       # (B, H, T) == x.permute(1,2,0)
    y = jax.lax.conv_general_dilated(
        x_nct, conv_w, window_strides=(1,), padding=pads,
        dimension_numbers=("NCH", "OIH", "NCH"))
    y = y + conv_b[None, :, None]
    y = jnp.transpose(y, (2, 0, 1)) * float(K) ** -0.5        # .permute(2,0,1), scale
    if act == "gelu":
        y = 0.5 * y * (1.0 + jax.lax.erf(y / jnp.sqrt(2.0)))
    elif act == "relu":
        y = jnp.maximum(y, 0.0)
    elif act == "swish":
        y = y * jax.nn.sigmoid(y)
    return y @ lin_w.T + lin_b


def make_params(key, hidden_size, filter_size, kernel_size):
    k1, k2, k3 = jax.random.split(key, 3)
    # Conv1d default init: U(-b, b) with b = 1/sqrt(fan_in)
    fan_in = hidden_size * kernel_size
    b = 1.0 / math.sqrt(fan_in)
    conv_w = jax.random.uniform(k1, (filter_size, hidden_size, kernel_size),
                                jnp.float32, -b, b)
    conv_b = jax.random.uniform(k2, (filter_size,), jnp.float32, -b, b)
    # Linear: xavier_uniform weight, zero bias
    bx = math.sqrt(6.0 / (filter_size + hidden_size))
    lin_w = jax.random.uniform(k3, (hidden_size, filter_size),
                               jnp.float32, -bx, bx)
    lin_b = jnp.zeros((hidden_size,), jnp.float32)
    return conv_w, conv_b, lin_w, lin_b


if __name__ == "__main__":
    T, B, hidden, filt = 8, 2, 32, 64
    key = jax.random.PRNGKey(0)
    kx, kp1, kp3 = jax.random.split(key, 3)
    x = jax.random.normal(kx, (T, B, hidden), jnp.float32)

    # bf16 matmul inputs (f32 accumulation) vs. exact-f32 reference -> loose tol.
    ATOL = RTOL = 2e-2

    # Case 1: module defaults (kernel_size=1, padding='SAME', act='gelu')
    p1 = make_params(kp1, hidden, filt, kernel_size=1)
    out1 = transformer_ffn_layer(x, *p1, kernel_size=1, padding="SAME",
                                 act="gelu")
    jax.block_until_ready(out1)
    ref1 = ref_forward(x, *p1, kernel_size=1, padding="SAME", act="gelu")
    assert out1.shape == (T, B, hidden)
    assert jnp.allclose(out1, ref1, atol=ATOL, rtol=RTOL), "mismatch (k=1)"

    # Case 2: kernel_size=3, SAME padding (exercises the im2col conv path)
    p3 = make_params(kp3, hidden, filt, kernel_size=3)
    out3 = transformer_ffn_layer(x, *p3, kernel_size=3, padding="SAME",
                                 act="gelu")
    jax.block_until_ready(out3)
    ref3 = ref_forward(x, *p3, kernel_size=3, padding="SAME", act="gelu")
    assert out3.shape == (T, B, hidden)
    assert jnp.allclose(out3, ref3, atol=ATOL, rtol=RTOL), "mismatch (k=3)"

    print("KERNEL_OK")
</pallas_src>

<mosaic_0001>
module attributes {stable_mosaic.version = 11 : i64} {
  func.func @_ffn_kernel(%arg0: i32, %arg1: i32, %arg2: memref<16x128xbf16, #tpu.memory_space<vmem>>, %arg3: memref<128x128xbf16, #tpu.memory_space<vmem>>, %arg4: memref<1x128xf32, #tpu.memory_space<vmem>>, %arg5: memref<128x128xbf16, #tpu.memory_space<vmem>>, %arg6: memref<1x128xf32, #tpu.memory_space<vmem>>, %arg7: memref<16x128xf32, #tpu.memory_space<vmem>>, %arg8: memref<16x128xf32, #tpu.memory_space<vmem>>) attributes {dimension_semantics = [#tpu.dimension_semantics<parallel>, #tpu.dimension_semantics<arbitrary>], iteration_bounds = array<i64: 1, 1>, scalar_prefetch = 0 : i64, scratch_operands = 1 : i64, tpu.core_type = #tpu.core_type<tc>, window_params = [{transform_indices = @transform_0, window_bounds = array<i64: 16, 128>}, {transform_indices = @transform_1, window_bounds = array<i64: 128, 128>}, {transform_indices = @transform_2, window_bounds = array<i64: 1, 128>}, {transform_indices = @transform_3, window_bounds = array<i64: 128, 128>}, {pipeline_mode = #tpu.pipeline_mode<synchronous>, transform_indices = @transform_4, window_bounds = array<i64: 1, 128>}, {transform_indices = @transform_5, window_bounds = array<i64: 16, 128>}]} {
    %c0_i32 = arith.constant 0 : i32
    %0 = arith.cmpi eq, %arg1, %c0_i32 : i32
    %1 = arith.extui %0 : i1 to i32
    %c0_i32_0 = arith.constant 0 : i32
    %2 = arith.cmpi ne, %1, %c0_i32_0 : i32
    scf.if %2 {
      %cst_18 = arith.constant 0.000000e+00 : f32
      %26 = vector.broadcast %cst_18 : f32 to vector<16x128xf32>
      %c0_19 = arith.constant 0 : index
      %c0_20 = arith.constant 0 : index
      %27 = vector.load %arg8[%c0_19, %c0_20] : memref<16x128xf32, #tpu.memory_space<vmem>>, vector<16x128xf32>
      tpu.vector_store %arg8[%c0_19, %c0_20], %26 {strides = array<i32>} : memref<16x128xf32, #tpu.memory_space<vmem>>, vector<16x128xf32>,
    } else {
    }
    %c0 = arith.constant 0 : index
    %c0_1 = arith.constant 0 : index
    %3 = vector.load %arg2[%c0, %c0_1] : memref<16x128xbf16, #tpu.memory_space<vmem>>, vector<16x128xbf16>
    %c0_2 = arith.constant 0 : index
    %c0_3 = arith.constant 0 : index
    %4 = vector.load %arg3[%c0_2, %c0_3] : memref<128x128xbf16, #tpu.memory_space<vmem>>, vector<128x128xbf16>
    %cst = arith.constant dense<0.000000e+00> : vector<16x128xf32>
    %5 = tpu.matmul %3, %4, %cst {dimension_numbers = #tpu.dot_dimension_numbers<[1], [0], [0], [1], [0, 0, 1, 1], [], []>} : vector<16x128xbf16>, vector<128x128xbf16>, vector<16x128xf32> -> vector<16x128xf32>
    %c0_4 = arith.constant 0 : index
    %c0_5 = arith.constant 0 : index
    %6 = vector.load %arg4[%c0_4, %c0_5] : memref<1x128xf32, #tpu.memory_space<vmem>>, vector<1x128xf32>
    %7 = vector.broadcast %6 : vector<1x128xf32> to vector<16x128xf32>
    %8 = arith.addf %5, %7 : vector<16x128xf32>
    %cst_6 = arith.constant 5.000000e-01 : f32
    %9 = vector.broadcast %cst_6 : f32 to vector<16x128xf32>
    %10 = arith.mulf %9, %8 : vector<16x128xf32>
    %cst_7 = arith.constant 0.707106769 : f32
    %11 = vector.broadcast %cst_7 : f32 to vector<16x128xf32>
    %12 = arith.mulf %8, %11 : vector<16x128xf32>
    %13 = math.erf %12 : vector<16x128xf32>
    %cst_8 = arith.constant 1.000000e+00 : f32
    %14 = vector.broadcast %cst_8 : f32 to vector<16x128xf32>
    %15 = arith.addf %14, %13 : vector<16x128xf32>
    %16 = arith.mulf %10, %15 : vector<16x128xf32>
    %c0_9 = arith.constant 0 : index
    %c0_10 = arith.constant 0 : index
    %17 = vector.load %arg8[%c0_9, %c0_10] : memref<16x128xf32, #tpu.memory_space<vmem>>, vector<16x128xf32>
    %18 = arith.truncf %16 : vector<16x128xf32> to vector<16x128xbf16>
    %c0_11 = arith.constant 0 : index
    %c0_12 = arith.constant 0 : index
    %19 = vector.load %arg5[%c0_11, %c0_12] : memref<128x128xbf16, #tpu.memory_space<vmem>>, vector<128x128xbf16>
    %cst_13 = arith.constant dense<0.000000e+00> : vector<16x128xf32>
    %20 = tpu.matmul %18, %19, %cst_13 {dimension_numbers = #tpu.dot_dimension_numbers<[1], [0], [0], [1], [0, 0, 1, 1], [], []>} : vector<16x128xbf16>, vector<128x128xbf16>, vector<16x128xf32> -> vector<16x128xf32>
    %21 = arith.addf %17, %20 : vector<16x128xf32>
    %c0_14 = arith.constant 0 : index
    %c0_15 = arith.constant 0 : index
    %22 = vector.load %arg8[%c0_14, %c0_15] : memref<16x128xf32, #tpu.memory_space<vmem>>, vector<16x128xf32>
    tpu.vector_store %arg8[%c0_14, %c0_15], %21 {strides = array<i32>} : memref<16x128xf32, #tpu.memory_space<vmem>>, vector<16x128xf32>,
    %c0_i32_16 = arith.constant 0 : i32
    %23 = arith.cmpi eq, %arg1, %c0_i32_16 : i32
    %24 = arith.extui %23 : i1 to i32
    %c0_i32_17 = arith.constant 0 : i32
    %25 = arith.cmpi ne, %24, %c0_i32_17 : i32
    scf.if %25 {
      %c0_18 = arith.constant 0 : index
      %c0_19 = arith.constant 0 : index
      %26 = vector.load %arg8[%c0_18, %c0_19] : memref<16x128xf32, #tpu.memory_space<vmem>>, vector<16x128xf32>
      %c0_20 = arith.constant 0 : index
      %c0_21 = arith.constant 0 : index
      %27 = vector.load %arg6[%c0_20, %c0_21] : memref<1x128xf32, #tpu.memory_space<vmem>>, vector<1x128xf32>
      %28 = vector.broadcast %27 : vector<1x128xf32> to vector<16x128xf32>
      %29 = arith.addf %26, %28 : vector<16x128xf32>
      %c0_22 = arith.constant 0 : index
      %c0_23 = arith.constant 0 : index
      %30 = vector.load %arg7[%c0_22, %c0_23] : memref<16x128xf32, #tpu.memory_space<vmem>>, vector<16x128xf32>
      tpu.vector_store %arg7[%c0_22, %c0_23], %29 {strides = array<i32>} : memref<16x128xf32, #tpu.memory_space<vmem>>, vector<16x128xf32>,
    } else {
    }
    return
  }
  func.func @transform_0(%arg0: i32, %arg1: i32) -> (i32, i32) {
    %c0_i32 = arith.constant 0 : i32
    %c0_i32_0 = arith.constant 0 : i32
    return %arg0, %c0_i32 : i32, i32
  }
  func.func @transform_1(%arg0: i32, %arg1: i32) -> (i32, i32) {
    %c0_i32 = arith.constant 0 : i32
    %c0_i32_0 = arith.constant 0 : i32
    return %c0_i32, %arg1 : i32, i32
  }
  func.func @transform_2(%arg0: i32, %arg1: i32) -> (i32, i32) {
    %c0_i32 = arith.constant 0 : i32
    %c0_i32_0 = arith.constant 0 : i32
    return %c0_i32, %arg1 : i32, i32
  }
  func.func @transform_3(%arg0: i32, %arg1: i32) -> (i32, i32) {
    %c0_i32 = arith.constant 0 : i32
    %c0_i32_0 = arith.constant 0 : i32
    return %arg1, %c0_i32 : i32, i32
  }
  func.func @transform_4(%arg0: i32, %arg1: i32) -> (i32, i32) {
    %c0_i32 = arith.constant 0 : i32
    %c0_i32_0 = arith.constant 0 : i32
    %c0_i32_1 = arith.constant 0 : i32
    return %c0_i32, %c0_i32_0 : i32, i32
  }
  func.func @transform_5(%arg0: i32, %arg1: i32) -> (i32, i32) {
    %c0_i32 = arith.constant 0 : i32
    %c0_i32_0 = arith.constant 0 : i32
    return %arg0, %c0_i32 : i32, i32
  }
}

</mosaic_0001>

<llo_original>
// kernel: tpu_custom_call.1
$region0: #{tpu_custom_call.1}
  #allocation0 [shape = 'u32[]', space=smem, size = 0x4, offset = 0x4, fixed_abs, tag = 'smem constant byte address 0x4 - core index']
  #allocation1 [shape = 'u32[72,128]{1,0:T(1,128)}', space=vmem, size = 0x9000, scoped, tag = 'internal scratch']
  #allocation2 [shape = 'f32[16,128]{1,0:T(8,128)}', space=vmem, size = 0x2000, scoped, tag = 'scratch operand']
  %s0 = inlined_call_operand.hbm [shape: bf16[16,128], index: 0, kind: input, shape index: {}]
  %s1 = inlined_call_operand.hbm [shape: bf16[128,128], index: 1, kind: input, shape index: {}]
  %s2 = inlined_call_operand.vmem [shape: f32[1,128], index: 2, kind: input, shape index: {}]
  %s3 = inlined_call_operand.hbm [shape: bf16[128,128], index: 3, kind: input, shape index: {}]
  %s4 = inlined_call_operand.vmem [shape: f32[1,128], index: 4, kind: input, shape index: {}]
  %s5 = inlined_call_operand.hbm [shape: f32[16,128], index: 5, kind: output, shape index: {}]
  %s6 = sld [smem:[#allocation0]]
  $region50: #{tpu_custom_call.1} parent=0
    _
  %s8 = ssub.s32 1, %s6
  %s9 = scalar_select 0, %s8, %s6
  $region1: #{tpu_custom_call.1} parent=0
    #allocation3 [shape = 'u8[4096]{0}', space=vmem, size = 0x1000, scoped, tag = 'input window, operand 0, single buffered']
    #allocation4 [shape = 's32[1]{0}', space=sflag, size = 0x4, scoped, tag = 'scoped memory for tpu_custom_call.1']
    #allocation5 [shape = 's32[1]{0}', space=sflag, size = 0x4, scoped, tag = 'scoped memory for tpu_custom_call.1']
    #allocation6 [shape = 'u8[32768]{0}', space=vmem, size = 0x8000, scoped, tag = 'input window, operand 1, single buffered']
    #allocation7 [shape = 's32[1]{0}', space=sflag, size = 0x4, scoped, tag = 'scoped memory for tpu_custom_call.1']
    #allocation8 [shape = 'u8[32768]{0}', space=vmem, size = 0x8000, scoped, tag = 'input window, operand 3, single buffered']
    #allocation9 [shape = 'u8[8192]{0}', space=vmem, size = 0x2000, scoped, tag = 'output window, operand 0, single buffered']
    %10 = vsyncpa [#allocation4], 0
    %11 = vsyncpa [#allocation7], 0
    %12 = vsyncpa [#allocation5], 0
    // Predicated region
    $region2: #{tpu_custom_call.1} parent=1 // pred_check
      _
    $region3: #{tpu_custom_call.1} parent=1 // pred_check_branch
      %14 = sbr.rel (0) target = $region5
    $region4: #{tpu_custom_call.1} parent=1 // pred_region
      %16 = vsyncadd [#allocation4], 0
      %s17 = sshll.u32 %s0, 4
      %s18 = int_to_ptr.hbm [resolvable:$true] %s17
      %s19 = sshll.u32 [#allocation3], 4
      %s20 = int_to_ptr.vmem [resolvable:$true] %s19
      %25 = dma.hbm_to_vmem [thread:$0]  %s18, 128, %s20, [#allocation4], 64, 64, 4
    $region5: #{tpu_custom_call.1} parent=1 // pred_fallthru
      _
    // Predicated region
    $region6: #{tpu_custom_call.1} parent=1 // pred_check
      _
    $region7: #{tpu_custom_call.1} parent=1 // pred_check_branch
      %27 = sbr.rel (0) target = $region9
    $region8: #{tpu_custom_call.1} parent=1 // pred_region
      %29 = vsyncadd [#allocation7], 0
      %s30 = sshll.u32 %s1, 4
      %s31 = int_to_ptr.hbm [resolvable:$true] %s30
      %s32 = sshll.u32 [#allocation6], 4
      %s33 = int_to_ptr.vmem [resolvable:$true] %s32
      %38 = dma.hbm_to_vmem [thread:$0]  %s31, 1024, %s33, [#allocation7], 64, 64, 4
    $region9: #{tpu_custom_call.1} parent=1 // pred_fallthru
      _
    // Predicated region
    $region10: #{tpu_custom_call.1} parent=1 // pred_check
      _
    $region11: #{tpu_custom_call.1} parent=1 // pred_check_branch
      %40 = sbr.rel (0) target = $region13
    $region12: #{tpu_custom_call.1} parent=1 // pred_region
      _
    $region13: #{tpu_custom_call.1} parent=1 // pred_fallthru
      _
    // Predicated region
    $region14: #{tpu_custom_call.1} parent=1 // pred_check
      _
    $region15: #{tpu_custom_call.1} parent=1 // pred_check_branch
      %42 = sbr.rel (0) target = $region17
    $region16: #{tpu_custom_call.1} parent=1 // pred_region
      %44 = vsyncadd [#allocation7], 0
      %s45 = sshll.u32 %s3, 4
      %s46 = int_to_ptr.hbm [resolvable:$true] %s45
      %s47 = sshll.u32 [#allocation8], 4
      %s48 = int_to_ptr.vmem [resolvable:$true] %s47
      %53 = dma.hbm_to_vmem [thread:$0]  %s46, 1024, %s48, [#allocation7], 64, 64, 4
    $region17: #{tpu_custom_call.1} parent=1 // pred_fallthru
      _
    // Predicated region
    $region18: #{tpu_custom_call.1} parent=1 // pred_check
      _
    $region19: #{tpu_custom_call.1} parent=1 // pred_check_branch
      %55 = sbr.rel (0) target = $region21
    $region20: #{tpu_custom_call.1} parent=1 // pred_region
      _
    $region21: #{tpu_custom_call.1} parent=1 // pred_fallthru
      _
    // Predicated region
    $region22: #{tpu_custom_call.1} parent=1 // pred_check
      _
    $region23: #{tpu_custom_call.1} parent=1 // pred_check_branch
      %57 = sbr.rel (0) target = $region25
    $region24: #{tpu_custom_call.1} parent=1 // pred_region
      %59 = dma.done [#allocation4], 128
    $region25: #{tpu_custom_call.1} parent=1 // pred_fallthru
      _
    // Predicated region
    $region26: #{tpu_custom_call.1} parent=1 // pred_check
      _
    $region27: #{tpu_custom_call.1} parent=1 // pred_check_branch
      %61 = sbr.rel (0) target = $region29
    $region28: #{tpu_custom_call.1} parent=1 // pred_region
      %63 = dma.done [#allocation7], 1024
    $region29: #{tpu_custom_call.1} parent=1 // pred_fallthru
      _
    // Predicated region
    $region30: #{tpu_custom_call.1} parent=1 // pred_check
      _
    $region31: #{tpu_custom_call.1} parent=1 // pred_check_branch
      %65 = sbr.rel (0) target = $region33
    $region32: #{tpu_custom_call.1} parent=1 // pred_region
      %67 = dma.done [#allocation7], 1024
    $region33: #{tpu_custom_call.1} parent=1 // pred_fallthru
      _
    %p68 = scmp.eq.s32.totalorder 0, 0
    // Predicated region
    $region34: #{tpu_custom_call.1} parent=1 // pred_check
      %p69 = pneg %p68
    $region35: #{tpu_custom_call.1} parent=1 // pred_check_branch
      %71 = sbr.rel (%p69) target = $region37
    $region36: #{tpu_custom_call.1} parent=1 // pred_region
      %72 = vst [vmem:[#allocation2] sm:$0xff] 0.0
      %73 = vst [vmem:[#allocation2 + $0x8] sm:$0xff] 0.0
    $region37: #{tpu_custom_call.1} parent=1 // pred_fallthru
      _
    %v74 = vld [vmem:[#allocation3] sm:$0xf]
    %v75 = vld [vmem:[#allocation3 + $0x4] sm:$0xf]
    %v76 = vld [vmem:[#allocation6] sm:$0xf]
    %v77 = vld [vmem:[#allocation6 + $0x4] sm:$0xf]
    %v78 = vld [vmem:[#allocation6 + $0x8] sm:$0xf]
    %v79 = vld [vmem:[#allocation6 + $0xc] sm:$0xf]
    %v80 = vld [vmem:[#allocation6 + $0x10] sm:$0xf]
    %v81 = vld [vmem:[#allocation6 + $0x14] sm:$0xf]
    %v82 = vld [vmem:[#allocation6 + $0x18] sm:$0xf]
    %v83 = vld [vmem:[#allocation6 + $0x1c] sm:$0xf]
    %v84 = vld [vmem:[#allocation6 + $0x20] sm:$0xf]
    %v85 = vld [vmem:[#allocation6 + $0x24] sm:$0xf]
    %v86 = vld [vmem:[#allocation6 + $0x28] sm:$0xf]
    %v87 = vld [vmem:[#allocation6 + $0x2c] sm:$0xf]
    %v88 = vld [vmem:[#allocation6 + $0x30] sm:$0xf]
    %v89 = vld [vmem:[#allocation6 + $0x34] sm:$0xf]
    %v90 = vld [vmem:[#allocation6 + $0x38] sm:$0xf]
    %v91 = vld [vmem:[#allocation6 + $0x3c] sm:$0xf]
    %v92 = vld [vmem:[%s2] sm:$0x1]
    %v94 = vperm.slane %v92, 0
    %v98 = vunpack.c.l.b16 %v74
    %v99 = vunpack.c.l.b16 %v75
    %v100 = vpack.c.b16 %v99, %v98
    %v118 = vunpack.c.l.b16 %v76
    %v119 = vunpack.c.l.b16 %v77
    %v120 = vunpack.c.l.b16 %v78
    %v121 = vunpack.c.l.b16 %v79
    %v122 = vunpack.c.l.b16 %v80
    %v123 = vunpack.c.l.b16 %v81
    %v124 = vunpack.c.l.b16 %v82
    %v125 = vunpack.c.l.b16 %v83
    %v126 = vunpack.c.l.b16 %v84
    %v127 = vunpack.c.l.b16 %v85
    %v128 = vunpack.c.l.b16 %v86
    %v129 = vunpack.c.l.b16 %v87
    %v130 = vunpack.c.l.b16 %v88
    %v131 = vunpack.c.l.b16 %v89
    %v132 = vunpack.c.l.b16 %v90
    %v133 = vunpack.c.l.b16 %v91
    %v134 = vpack.c.b16 %v119, %v118
    %v135 = vpack.c.b16 %v121, %v120
    %v136 = vpack.c.b16 %v123, %v122
    %v137 = vpack.c.b16 %v125, %v124
    %v138 = vpack.c.b16 %v127, %v126
    %v139 = vpack.c.b16 %v129, %v128
    %v140 = vpack.c.b16 %v131, %v130
    %v141 = vpack.c.b16 %v133, %v132
    %150 = vmatpush.bf16.msra.mxu0 %v141
    %151 = vmatpush.bf16.msra.mxu0 %v140
    %152 = vmatpush.bf16.msra.mxu0 %v139
    %153 = vmatpush.bf16.msra.mxu0 %v138
    %154 = vmatpush.bf16.msra.mxu0 %v137
    %155 = vmatpush.bf16.msra.mxu0 %v136
    %156 = vmatpush.bf16.msra.mxu0 %v135
    %157 = vmatpush.bf16.msra.mxu0 %v134
    %158 = vmatmul.bf16.gmra.mxu0 %v100
    %v159 = vpop.f32.mrf.mxu0
    %v160 = vadd.f32 %v94, %v159
    %v161 = vpop.f32.mrf.mxu0
    %v162 = vadd.f32 %v94, %v161
    %163 = vdwg.mxu0
    %v164 = vmul.f32 %v160, 0.5
    %v165 = vmul.f32 %v162, 0.5
    %v166 = vmul.f32 %v160, 0.70710677
    %v167 = vmul.f32 %v162, 0.70710677
    %v168 = vmul.f32 %v166, %v166
    %v169 = vmin.f32 16.0, %v168
    %v170 = vmul.f32 %v169, 2.1237322e-06
    %v171 = vadd.f32 %v170, 0.00028619796
    %v172 = vmul.f32 %v169, %v171
    %v173 = vadd.f32 %v172, 0.0036580483
    %v174 = vmul.f32 %v169, %v173
    %v175 = vadd.f32 %v174, 0.05243302
    %v176 = vmul.f32 %v169, %v175
    %v177 = vadd.f32 %v176, 0.18741608
    %v178 = vmul.f32 %v169, %v177
    %v179 = vadd.f32 %v178, 1.1283791
    %v180 = vmul.f32 %v166, %v179
    %v181 = vmul.f32 %v169, 3.8918573e-05
    %v182 = vadd.f32 %v181, 0.001143296
    %v183 = vmul.f32 %v169, %v182
    %v184 = vadd.f32 %v183, 0.014752088
    %v185 = vmul.f32 %v169, %v184
    %v186 = vadd.f32 %v185, 0.112945676
    %v187 = vmul.f32 %v169, %v186
    %v188 = vadd.f32 %v187, 0.4994258
    %v189 = vmul.f32 %v169, %v188
    %v190 = vadd.f32 %v189, 1.0
    %v191 = vrcp.pop %v190
    %v192 = vmul.f32 %v190, %v191
    %v193 = vsub.f32 1.0, %v192
    %v194 = vmul.f32 %v191, %v193
    %v195 = vadd.f32 %v191, %v194
    %vm196 = vweird.f32 %v190
    %vm197 = vweird.f32 %v191
    %vm198 = vmor %vm196, %vm197
    %v199 = vsel %vm198, %v191, %v195
    %v200 = vand.u32 2147483647, %v190
    %vm201 = vcmp.eq.f32.partialorder %v200, 8.507059e+37
    %v202 = vand.u32 %v190, 2147483648
    %v203 = vor.u32 1.1754944e-38, %v202
    %v204 = vsel %vm201, %v203, %v199
    %v205 = vmul.f32 %v180, %v204
    %v206 = vmin.f32 %v205, 1.0
    %v207 = vmax.f32 %v206, -1.0
    %v208 = vmul.f32 %v167, %v167
    %v209 = vmin.f32 16.0, %v208
    %v210 = vmul.f32 %v209, 2.1237322e-06
    %v211 = vadd.f32 %v210, 0.00028619796
    %v212 = vmul.f32 %v209, %v211
    %v213 = vadd.f32 %v212, 0.0036580483
    %v214 = vmul.f32 %v209, %v213
    %v215 = vadd.f32 %v214, 0.05243302
    %v216 = vmul.f32 %v209, %v215
    %v217 = vadd.f32 %v216, 0.18741608
    %v218 = vmul.f32 %v209, %v217
    %v219 = vadd.f32 %v218, 1.1283791
    %v220 = vmul.f32 %v167, %v219
    %v221 = vmul.f32 %v209, 3.8918573e-05
    %v222 = vadd.f32 %v221, 0.001143296
    %v223 = vmul.f32 %v209, %v222
    %v224 = vadd.f32 %v223, 0.014752088
    %v225 = vmul.f32 %v209, %v224
    %v226 = vadd.f32 %v225, 0.112945676
    %v227 = vmul.f32 %v209, %v226
    %v228 = vadd.f32 %v227, 0.4994258
    %v229 = vmul.f32 %v209, %v228
    %v230 = vadd.f32 %v229, 1.0
    %v231 = vrcp.pop %v230
    %v232 = vmul.f32 %v230, %v231
    %v233 = vsub.f32 1.0, %v232
    %v234 = vmul.f32 %v231, %v233
    %v235 = vadd.f32 %v231, %v234
    %vm236 = vweird.f32 %v230
    %vm237 = vweird.f32 %v231
    %vm238 = vmor %vm236, %vm237
    %v239 = vsel %vm238, %v231, %v235
    %v240 = vand.u32 2147483647, %v230
    %vm241 = vcmp.eq.f32.partialorder %v240, 8.507059e+37
    %v242 = vand.u32 %v230, 2147483648
    %v243 = vor.u32 1.1754944e-38, %v242
    %v244 = vsel %vm241, %v243, %v239
    %v245 = vmul.f32 %v220, %v244
    %v246 = vmin.f32 %v245, 1.0
    %v247 = vmax.f32 %v246, -1.0
    %v248 = vadd.f32 %v207, 1.0
    %v249 = vadd.f32 %v247, 1.0
    %v250 = vmul.f32 %v164, %v248
    %v251 = vmul.f32 %v165, %v249
    %v252 = vld [vmem:[#allocation2] sm:$0xff]
    %v253 = vld [vmem:[#allocation2 + $0x8] sm:$0xff]
    %v254 = vpack.c.bf16 %v251, %v250
    %v255 = vld [vmem:[#allocation8] sm:$0xf]
    %v256 = vld [vmem:[#allocation8 + $0x4] sm:$0xf]
    %v257 = vld [vmem:[#allocation8 + $0x8] sm:$0xf]
    %v258 = vld [vmem:[#allocation8 + $0xc] sm:$0xf]
    %v259 = vld [vmem:[#allocation8 + $0x10] sm:$0xf]
    %v260 = vld [vmem:[#allocation8 + $0x14] sm:$0xf]
    %v261 = vld [vmem:[#allocation8 + $0x18] sm:$0xf]
    %v262 = vld [vmem:[#allocation8 + $0x1c] sm:$0xf]
    %v263 = vld [vmem:[#allocation8 + $0x20] sm:$0xf]
    %v264 = vld [vmem:[#allocation8 + $0x24] sm:$0xf]
    %v265 = vld [vmem:[#allocation8 + $0x28] sm:$0xf]
    %v266 = vld [vmem:[#allocation8 + $0x2c] sm:$0xf]
    %v267 = vld [vmem:[#allocation8 + $0x30] sm:$0xf]
    %v268 = vld [vmem:[#allocation8 + $0x34] sm:$0xf]
    %v269 = vld [vmem:[#allocation8 + $0x38] sm:$0xf]
    %v270 = vld [vmem:[#allocation8 + $0x3c] sm:$0xf]
    %v287 = vunpack.c.l.b16 %v255
    %v288 = vunpack.c.l.b16 %v256
    %v289 = vunpack.c.l.b16 %v257
    %v290 = vunpack.c.l.b16 %v258
    %v291 = vunpack.c.l.b16 %v259
    %v292 = vunpack.c.l.b16 %v260
    %v293 = vunpack.c.l.b16 %v261
    %v294 = vunpack.c.l.b16 %v262
    %v295 = vunpack.c.l.b16 %v263
    %v296 = vunpack.c.l.b16 %v264
    %v297 = vunpack.c.l.b16 %v265
    %v298 = vunpack.c.l.b16 %v266
    %v299 = vunpack.c.l.b16 %v267
    %v300 = vunpack.c.l.b16 %v268
    %v301 = vunpack.c.l.b16 %v269
    %v302 = vunpack.c.l.b16 %v270
    %v303 = vpack.c.b16 %v288, %v287
    %v304 = vpack.c.b16 %v290, %v289
    %v305 = vpack.c.b16 %v292, %v291
    %v306 = vpack.c.b16 %v294, %v293
    %v307 = vpack.c.b16 %v296, %v295
    %v308 = vpack.c.b16 %v298, %v297
    %v309 = vpack.c.b16 %v300, %v299
    %v310 = vpack.c.b16 %v302, %v301
    %319 = vmatpush.bf16.msra.mxu0 %v310
    %320 = vmatpush.bf16.msra.mxu0 %v309
    %321 = vmatpush.bf16.msra.mxu0 %v308
    %322 = vmatpush.bf16.msra.mxu0 %v307
    %323 = vmatpush.bf16.msra.mxu0 %v306
    %324 = vmatpush.bf16.msra.mxu0 %v305
    %325 = vmatpush.bf16.msra.mxu0 %v304
    %326 = vmatpush.bf16.msra.mxu0 %v303
    %327 = vmatmul.bf16.gmra.mxu0 %v254
    %v328 = vpop.f32.mrf.mxu0
    %v329 = vadd.f32 0.0, %v328
    %v330 = vpop.f32.mrf.mxu0
    %v331 = vadd.f32 0.0, %v330
    %332 = vdwg.mxu0
    %v333 = vadd.f32 %v252, %v329
    %v334 = vadd.f32 %v253, %v331
    %335 = vst [vmem:[#allocation2] sm:$0xff] %v333
    %336 = vst [vmem:[#allocation2 + $0x8] sm:$0xff] %v334
    // Predicated region
    $region38: #{tpu_custom_call.1} parent=1 // pred_check
      %p337 = pneg %p68
    $region39: #{tpu_custom_call.1} parent=1 // pred_check_branch
      %339 = sbr.rel (%p337) target = $region41
    $region40: #{tpu_custom_call.1} parent=1 // pred_region
      %v340 = vld [vmem:[#allocation2] sm:$0xff]
      %v341 = vld [vmem:[#allocation2 + $0x8] sm:$0xff]
      %v342 = vld [vmem:[%s4] sm:$0x1]
      %v344 = vperm.slane %v342, 0
      %v346 = vadd.f32 %v340, %v344
      %v347 = vadd.f32 %v341, %v344
      %348 = vst [vmem:[#allocation9] sm:$0xff] %v346
      %349 = vst [vmem:[#allocation9 + $0x8] sm:$0xff] %v347
    $region41: #{tpu_custom_call.1} parent=1 // pred_fallthru
      _
    // Predicated region
    $region42: #{tpu_custom_call.1} parent=1 // pred_check
      _
    $region43: #{tpu_custom_call.1} parent=1 // pred_check_branch
      %351 = sbr.rel (0) target = $region45
    $region44: #{tpu_custom_call.1} parent=1 // pred_region
      %353 = vsyncadd [#allocation5], 0
      %s354 = sshll.u32 [#allocation9], 4
      %s355 = int_to_ptr.vmem [resolvable:$true] %s354
      %s356 = sshll.u32 %s5, 4
      %s357 = int_to_ptr.hbm [resolvable:$true] %s356
      %362 = dma.vmem_to_hbm [thread:$0]  %s355, 256, %s357, [#allocation5], 128, 128, 8
    $region45: #{tpu_custom_call.1} parent=1 // pred_fallthru
      _
    // Predicated region
    $region46: #{tpu_custom_call.1} parent=1 // pred_check
      _
    $region47: #{tpu_custom_call.1} parent=1 // pred_check_branch
      %364 = sbr.rel (0) target = $region49
    $region48: #{tpu_custom_call.1} parent=1 // pred_region
      %366 = dma.done [#allocation5], 256
    $region49: #{tpu_custom_call.1} parent=1 // pred_fallthru
      _
    %367 = vsyncpa [#allocation4], 1
    %368 = vsyncpa [#allocation7], 1
    %369 = vsyncpa [#allocation5], 1

</llo_original>
